<compile_context>
chip_gen: v6e
topology: v6e:2x2x1
jax: 0.10.0
libtpu: 0.0.40
codegen_flags: <defaults>
</compile_context>

<pallas_src>
import functools

import jax
import jax.numpy as jnp
from jax import lax
from jax.experimental import pallas as pl
from jax.experimental.pallas import tpu as pltpu

IN_DIM = 7          # logical input features
IN_PAD = 8          # padded input features (sublane-friendly)
H1 = 256
H2 = 128
OUT_DIM = 1
OUT_ROWS = 8        # w3 row replicated x8 -> (8, tb) lane-dense output block


def mlp_kernel(x_ref, w1_ref, b1_ref, w2_ref, b2_ref, w3r_ref, scalars_ref,
               o_ref):
    """Whole forward pass fused in VMEM: 3 MXU matmuls + VPU/EUP elementwise."""
    alpha = scalars_ref[0]       # PReLU alpha    (scalar, SMEM)
    b3 = scalars_ref[1]          # layer_out bias (scalar, SMEM)

    x = x_ref[...]                                              # (tb, 8) bf16

    # layer_1 + ReLU (bf16 MXU inputs, f32 accumulation)
    h1 = jnp.dot(x, w1_ref[...], preferred_element_type=jnp.float32)
    h1 = jnp.maximum(h1 + b1_ref[...], 0.0)

    # layer_2 + PReLU (single learnable alpha broadcast over all channels)
    h2 = jnp.dot(h1.astype(jnp.bfloat16), w2_ref[...],
                 preferred_element_type=jnp.float32) + b2_ref[...]
    h2 = jnp.where(h2 >= 0.0, h2, alpha * h2)

    # Dropout(p=0.5): identity in inference mode.
    # TODO(synk): training-mode stochastic dropout (pltpu.prng_random_bits) not emitted.

    # layer_out + Sigmoid.  Computed transposed so the batch lands on the lane
    # axis:  (8, H2) replicated-w3-row  X  (tb, H2)^T  ->  (8, tb).
    h3 = lax.dot_general(
        w3r_ref[...], h2.astype(jnp.bfloat16),
        dimension_numbers=(((1,), (1,)), ((), ())),
        preferred_element_type=jnp.float32) + b3

    # sigmoid = 1 / (1 + exp(-h3)); exp and approx reciprocal both use the EUP.
    o_ref[0] = pl.reciprocal(1.0 + jnp.exp(-h3), approx=True)


def _choose_tb(batch):
    """Big tiles (>=128 rows) amortize per-step pipeline overhead, capped at
    1024 (a few MiB of VMEM, safe even for v7x's smaller VMEM), and ~B/2 so
    larger batches keep >=2 grid steps for v7x's two TensorCores."""
    half = pl.next_power_of_2(max(int(batch), 1)) // 2
    return int(min(1024, max(128, half)))


@functools.partial(jax.jit, static_argnames=("tb",))
def salary_predictor_forward(x, params, *, tb=None):
    """x: (B, 7) float32.  Returns (B, 1) float32."""
    w1, b1, w2, b2, w3, b3, alpha = params
    B = x.shape[0]
    if tb is None:
        tb = _choose_tb(B)
    g = int(pl.cdiv(B, tb))
    b_pad = g * tb

    bf = jnp.bfloat16
    # One-time wrapper-side preprocessing (outside the kernel grid):
    x_p = jnp.pad(x.astype(jnp.float32),
                  ((0, b_pad - B), (0, IN_PAD - IN_DIM))).astype(bf)
    w1_p = jnp.pad(w1, ((0, IN_PAD - IN_DIM), (0, 0))).astype(bf)
    w2_b = w2.astype(bf)
    w3_r = jnp.broadcast_to(w3.reshape(1, H2), (OUT_ROWS, H2)).astype(bf)
    b1_r = b1.reshape(1, H1).astype(jnp.float32)
    b2_r = b2.reshape(1, H2).astype(jnp.float32)
    scalars = jnp.concatenate(
        [alpha.reshape(1), b3.reshape(1)]).astype(jnp.float32)

    flops = 2 * b_pad * (IN_PAD * H1 + H1 * H2 + OUT_ROWS * H2)
    bytes_accessed = (
        b_pad * IN_PAD * 2                                      # x (bf16)
        + (IN_PAD * H1 + H1 * H2 + OUT_ROWS * H2) * 2           # weights (bf16)
        + (H1 + H2 + 2) * 4                                     # biases + scalars
        + g * OUT_ROWS * tb * 4)                                # output (f32)

    out_tiles = pl.pallas_call(
        mlp_kernel,
        out_shape=jax.ShapeDtypeStruct((g, OUT_ROWS, tb), jnp.float32),
        grid_spec=pltpu.PrefetchScalarGridSpec(
            num_scalar_prefetch=0,
            grid=(g,),
            in_specs=[
                pl.BlockSpec((tb, IN_PAD), lambda i: (i, 0)),       # x tile
                pl.BlockSpec((IN_PAD, H1), lambda i: (0, 0)),       # w1
                pl.BlockSpec((1, H1), lambda i: (0, 0)),            # b1
                pl.BlockSpec((H1, H2), lambda i: (0, 0)),           # w2
                pl.BlockSpec((1, H2), lambda i: (0, 0)),            # b2
                pl.BlockSpec((OUT_ROWS, H2), lambda i: (0, 0)),     # w3 row x8
                pl.BlockSpec(memory_space=pltpu.MemorySpace.SMEM),  # [alpha, b3]
            ],
            out_specs=pl.BlockSpec((1, OUT_ROWS, tb), lambda i: (i, 0, 0)),
        ),
        compiler_params=pltpu.CompilerParams(
            dimension_semantics=("parallel",)),
        cost_estimate=pl.CostEstimate(
            flops=flops, transcendentals=b_pad, bytes_accessed=bytes_accessed),
    )(x_p, w1_p, b1_r, w2_b, b2_r, w3_r, scalars)

    # Row 0 of each (8, tb) block carries the result; lay batch back out as (B, 1).
    return out_tiles[:, 0, :].reshape(-1)[:B].reshape(B, OUT_DIM)


def init_params(key):
    """Deterministic init mimicking PyTorch Linear default (U[-1/sqrt(fan_in), +])."""
    ks = jax.random.split(key, 6)

    def linear(kw, kb, fan_in, fan_out):
        bound = 1.0 / jnp.sqrt(float(fan_in))
        w = jax.random.uniform(kw, (fan_in, fan_out), jnp.float32, -bound, bound)
        b = jax.random.uniform(kb, (1, fan_out), jnp.float32, -bound, bound)
        return w, b

    w1, b1 = linear(ks[0], ks[1], IN_DIM, H1)
    w2, b2 = linear(ks[2], ks[3], H1, H2)
    w3, b3 = linear(ks[4], ks[5], H2, OUT_DIM)
    alpha = jnp.full((1, 1), 0.25, jnp.float32)   # PReLU default init
    return (w1, b1, w2, b2, w3, b3, alpha)


def reference_forward_f32(x, params):
    w1, b1, w2, b2, w3, b3, alpha = params
    h1 = jnp.maximum(x @ w1 + b1, 0.0)
    h2 = h1 @ w2 + b2
    h2 = jnp.where(h2 >= 0, h2, alpha.reshape(()) * h2)
    return jax.nn.sigmoid(h2 @ w3 + b3)


def reference_forward_mixed(x, params):
    """Mirrors the kernel's bf16-input / f32-accumulate arithmetic."""
    w1, b1, w2, b2, w3, b3, alpha = params
    bf = jnp.bfloat16
    h1 = jnp.dot(x.astype(bf), w1.astype(bf),
                 preferred_element_type=jnp.float32) + b1
    h1 = jnp.maximum(h1, 0.0)
    h2 = jnp.dot(h1.astype(bf), w2.astype(bf),
                 preferred_element_type=jnp.float32) + b2
    h2 = jnp.where(h2 >= 0, h2, alpha.reshape(()) * h2)
    h3 = jnp.dot(h2.astype(bf), w3.astype(bf),
                 preferred_element_type=jnp.float32) + b3
    return jax.nn.sigmoid(h3)


if __name__ == "__main__":
    key = jax.random.PRNGKey(0)
    kp, kx = jax.random.split(key)
    params = init_params(kp)

    batch = 300     # small; not a tile multiple -> exercises padding + 2-step grid
    x = jax.random.normal(kx, (batch, IN_DIM), jnp.float32)

    out = salary_predictor_forward(x, params)
    out = jax.block_until_ready(out)

    ref_mixed = reference_forward_mixed(x, params)
    ref_f32 = reference_forward_f32(x, params)

    assert out.shape == (batch, OUT_DIM), out.shape
    assert jnp.allclose(out, ref_mixed, atol=2e-3), (
        "mismatch vs bf16/f32 reference, max|d|=%e"
        % float(jnp.max(jnp.abs(out - ref_mixed))))
    assert jnp.allclose(out, ref_f32, atol=5e-2), (
        "mismatch vs f32 reference, max|d|=%e"
        % float(jnp.max(jnp.abs(out - ref_f32))))

    print("KERNEL_OK")
</pallas_src>

<mosaic_0001>
module attributes {stable_mosaic.version = 11 : i64} {
  func.func @mlp_kernel(%arg0: i32, %arg1: memref<256x8xbf16, #tpu.memory_space<vmem>>, %arg2: memref<8x256xbf16, #tpu.memory_space<vmem>>, %arg3: memref<1x256xf32, #tpu.memory_space<vmem>>, %arg4: memref<256x128xbf16, #tpu.memory_space<vmem>>, %arg5: memref<1x128xf32, #tpu.memory_space<vmem>>, %arg6: memref<8x128xbf16, #tpu.memory_space<vmem>>, %arg7: memref<2xf32, #tpu.memory_space<smem>>, %arg8: memref<1x8x256xf32, #tpu.memory_space<vmem>>) attributes {dimension_semantics = [#tpu.dimension_semantics<parallel>], iteration_bounds = array<i64: 2>, scalar_prefetch = 0 : i64, scratch_operands = 0 : i64, tpu.core_type = #tpu.core_type<tc>, window_params = [{transform_indices = @transform_0, window_bounds = array<i64: 256, 8>}, {pipeline_mode = #tpu.pipeline_mode<synchronous>, transform_indices = @transform_1, window_bounds = array<i64: 8, 256>}, {pipeline_mode = #tpu.pipeline_mode<synchronous>, transform_indices = @transform_2, window_bounds = array<i64: 1, 256>}, {pipeline_mode = #tpu.pipeline_mode<synchronous>, transform_indices = @transform_3, window_bounds = array<i64: 256, 128>}, {pipeline_mode = #tpu.pipeline_mode<synchronous>, transform_indices = @transform_4, window_bounds = array<i64: 1, 128>}, {pipeline_mode = #tpu.pipeline_mode<synchronous>, transform_indices = @transform_5, window_bounds = array<i64: 8, 128>}, {transform_indices = @transform_6, window_bounds = array<i64: 2>}, {transform_indices = @transform_7, window_bounds = array<i64: 1, 8, 256>}]} {
    %c0 = arith.constant 0 : index
    %0 = memref.load %arg7[%c0] : memref<2xf32, #tpu.memory_space<smem>>
    %c1 = arith.constant 1 : index
    %1 = memref.load %arg7[%c1] : memref<2xf32, #tpu.memory_space<smem>>
    %c0_0 = arith.constant 0 : index
    %c0_1 = arith.constant 0 : index
    %2 = vector.load %arg1[%c0_0, %c0_1] : memref<256x8xbf16, #tpu.memory_space<vmem>>, vector<256x8xbf16>
    %c0_2 = arith.constant 0 : index
    %c0_3 = arith.constant 0 : index
    %3 = vector.load %arg2[%c0_2, %c0_3] : memref<8x256xbf16, #tpu.memory_space<vmem>>, vector<8x256xbf16>
    %cst = arith.constant dense<0.000000e+00> : vector<256x256xf32>
    %4 = tpu.matmul %2, %3, %cst {dimension_numbers = #tpu.dot_dimension_numbers<[1], [0], [0], [1], [0, 0, 1, 1], [], []>} : vector<256x8xbf16>, vector<8x256xbf16>, vector<256x256xf32> -> vector<256x256xf32>
    %c0_4 = arith.constant 0 : index
    %c0_5 = arith.constant 0 : index
    %5 = vector.load %arg3[%c0_4, %c0_5] : memref<1x256xf32, #tpu.memory_space<vmem>>, vector<1x256xf32>
    %6 = vector.broadcast %5 : vector<1x256xf32> to vector<256x256xf32>
    %7 = arith.addf %4, %6 : vector<256x256xf32>
    %cst_6 = arith.constant 0.000000e+00 : f32
    %8 = vector.broadcast %cst_6 : f32 to vector<256x256xf32>
    %9 = arith.maximumf %7, %8 : vector<256x256xf32>
    %10 = arith.truncf %9 : vector<256x256xf32> to vector<256x256xbf16>
    %c0_7 = arith.constant 0 : index
    %c0_8 = arith.constant 0 : index
    %11 = vector.load %arg4[%c0_7, %c0_8] : memref<256x128xbf16, #tpu.memory_space<vmem>>, vector<256x128xbf16>
    %cst_9 = arith.constant dense<0.000000e+00> : vector<256x128xf32>
    %12 = tpu.matmul %10, %11, %cst_9 {dimension_numbers = #tpu.dot_dimension_numbers<[1], [0], [0], [1], [0, 0, 1, 1], [], []>} : vector<256x256xbf16>, vector<256x128xbf16>, vector<256x128xf32> -> vector<256x128xf32>
    %c0_10 = arith.constant 0 : index
    %c0_11 = arith.constant 0 : index
    %13 = vector.load %arg5[%c0_10, %c0_11] : memref<1x128xf32, #tpu.memory_space<vmem>>, vector<1x128xf32>
    %14 = vector.broadcast %13 : vector<1x128xf32> to vector<256x128xf32>
    %15 = arith.addf %12, %14 : vector<256x128xf32>
    %cst_12 = arith.constant 0.000000e+00 : f32
    %16 = vector.broadcast %cst_12 : f32 to vector<256x128xf32>
    %17 = arith.cmpf oge, %15, %16 : vector<256x128xf32>
    %18 = vector.broadcast %0 : f32 to vector<256x128xf32>
    %19 = arith.mulf %18, %15 : vector<256x128xf32>
    %20 = arith.select %17, %15, %19 : vector<256x128xi1>, vector<256x128xf32>
    %c0_13 = arith.constant 0 : index
    %c0_14 = arith.constant 0 : index
    %21 = vector.load %arg6[%c0_13, %c0_14] : memref<8x128xbf16, #tpu.memory_space<vmem>>, vector<8x128xbf16>
    %22 = arith.truncf %20 : vector<256x128xf32> to vector<256x128xbf16>
    %cst_15 = arith.constant dense<0.000000e+00> : vector<8x256xf32>
    %23 = tpu.matmul %21, %22, %cst_15 {dimension_numbers = #tpu.dot_dimension_numbers<[1], [1], [0], [0], [0, 0, 1, 0], [], []>} : vector<8x128xbf16>, vector<256x128xbf16>, vector<8x256xf32> -> vector<8x256xf32>
    %24 = vector.broadcast %1 : f32 to vector<8x256xf32>
    %25 = arith.addf %23, %24 : vector<8x256xf32>
    %cst_16 = arith.constant 0.000000e+00 : f32
    %26 = vector.broadcast %cst_16 : f32 to vector<8x256xf32>
    %27 = arith.subf %26, %25 : vector<8x256xf32>
    %28 = math.exp %27 : vector<8x256xf32>
    %cst_17 = arith.constant 1.000000e+00 : f32
    %29 = vector.broadcast %cst_17 : f32 to vector<8x256xf32>
    %30 = arith.addf %29, %28 : vector<8x256xf32>
    %31 = tpu.reciprocal %30 {approx = true} : vector<8x256xf32> -> vector<8x256xf32>
    %c0_18 = arith.constant 0 : index
    %c0_19 = arith.constant 0 : index
    %c0_20 = arith.constant 0 : index
    %32 = vector.load %arg8[%c0_18, %c0_19, %c0_20] : memref<1x8x256xf32, #tpu.memory_space<vmem>>, vector<1x8x256xf32>
    %33 = vector.shape_cast %32 : vector<1x8x256xf32> to vector<8x256xf32>
    %34 = vector.shape_cast %31 : vector<8x256xf32> to vector<1x8x256xf32>
    tpu.vector_store %arg8[%c0_18, %c0_19, %c0_20], %34 {strides = array<i32>} : memref<1x8x256xf32, #tpu.memory_space<vmem>>, vector<1x8x256xf32>,
    return
  }
  func.func @transform_0(%arg0: i32) -> (i32, i32) {
    %c0_i32 = arith.constant 0 : i32
    %c0_i32_0 = arith.constant 0 : i32
    return %arg0, %c0_i32 : i32, i32
  }
  func.func @transform_1(%arg0: i32) -> (i32, i32) {
    %c0_i32 = arith.constant 0 : i32
    %c0_i32_0 = arith.constant 0 : i32
    %c0_i32_1 = arith.constant 0 : i32
    return %c0_i32, %c0_i32_0 : i32, i32
  }
  func.func @transform_2(%arg0: i32) -> (i32, i32) {
    %c0_i32 = arith.constant 0 : i32
    %c0_i32_0 = arith.constant 0 : i32
    %c0_i32_1 = arith.constant 0 : i32
    return %c0_i32, %c0_i32_0 : i32, i32
  }
  func.func @transform_3(%arg0: i32) -> (i32, i32) {
    %c0_i32 = arith.constant 0 : i32
    %c0_i32_0 = arith.constant 0 : i32
    %c0_i32_1 = arith.constant 0 : i32
    return %c0_i32, %c0_i32_0 : i32, i32
  }
  func.func @transform_4(%arg0: i32) -> (i32, i32) {
    %c0_i32 = arith.constant 0 : i32
    %c0_i32_0 = arith.constant 0 : i32
    %c0_i32_1 = arith.constant 0 : i32
    return %c0_i32, %c0_i32_0 : i32, i32
  }
  func.func @transform_5(%arg0: i32) -> (i32, i32) {
    %c0_i32 = arith.constant 0 : i32
    %c0_i32_0 = arith.constant 0 : i32
    %c0_i32_1 = arith.constant 0 : i32
    return %c0_i32, %c0_i32_0 : i32, i32
  }
  func.func @transform_6(%arg0: i32) -> i32 {
    %c0_i32 = arith.constant 0 : i32
    %c0_i32_0 = arith.constant 0 : i32
    return %c0_i32 : i32
  }
  func.func @transform_7(%arg0: i32) -> (i32, i32, i32) {
    %c0_i32 = arith.constant 0 : i32
    %c0_i32_0 = arith.constant 0 : i32
    %c0_i32_1 = arith.constant 0 : i32
    return %arg0, %c0_i32, %c0_i32_0 : i32, i32, i32
  }
}

</mosaic_0001>

<llo_original>
// kernel: salary_predictor_forward.1
$region0: #{salary_predictor_forward.1}
  #allocation0 [shape = 'u32[]', space=smem, size = 0x4, offset = 0x4, fixed_abs, tag = 'smem constant byte address 0x4 - core index']
  #allocation1 [shape = 'u32[144,128]{1,0:T(1,128)}', space=vmem, size = 0x12000, scoped, tag = 'internal scratch']
  %s0 = inlined_call_operand.vmem [shape: bf16[512,8], index: 0, kind: input, shape index: {}]
  %s1 = inlined_call_operand.vmem [shape: bf16[8,256], index: 1, kind: input, shape index: {}]
  %s2 = inlined_call_operand.vmem [shape: f32[1,256], index: 2, kind: input, shape index: {}]
  %s3 = inlined_call_operand.vmem [shape: bf16[256,128], index: 3, kind: input, shape index: {}]
  %s4 = inlined_call_operand.vmem [shape: f32[1,128], index: 4, kind: input, shape index: {}]
  %s5 = inlined_call_operand.vmem [shape: bf16[8,128], index: 5, kind: input, shape index: {}]
  %s6 = inlined_call_operand.vmem [shape: f32[2], index: 6, kind: input, shape index: {}]
  %s7 = inlined_call_operand.vmem [shape: f32[2,8,256], index: 7, kind: output, shape index: {}]
  %s8 = sld [smem:[#allocation0]]
  $region65: #{salary_predictor_forward.1} parent=0
    _
  %s10 = ssub.s32 1, %s8
  %s11 = scalar_select 0, %s10, %s8
  $region1: #{salary_predictor_forward.1} parent=0
    #allocation2 [shape = 'u8[512]{0}', space=smem, size = 0x200, scoped, tag = 'input window, operand 6, single buffered']
    #allocation3 [shape = 's32[2]{0}', space=sflag, size = 0x8, scoped, tag = 'scoped memory for salary_predictor_forward.1']
    %12 = vsyncpa [#allocation3], 0
    loop: start=0, step=1, limit=4
    $region2: #{salary_predictor_forward.1} parent=1 // loop_pre_header
      _
    $region3: #{salary_predictor_forward.1} parent=1 // loop_header
      %s14 = sphi 0, %s18
      %p15 = scmp.ge.s32.totalorder %s14, 4
      %s24 = sphi 0, %s26
      %s27 = sphi 0, %s24
      %s28 = sphi 0, %s27
      %s44 = sphi 0, %s28
      %s48 = sphi 0, %s48
      %s50 = sphi 0, %s48
      %s51 = sphi 0, %s50
      %s65 = sphi 0, %s51
      %s69 = sphi 0, %s69
      %s71 = sphi 0, %s69
      %s72 = sphi 0, %s71
      %s86 = sphi 0, %s72
      %s90 = sphi 0, %s90
      %s92 = sphi 0, %s90
      %s93 = sphi 0, %s92
      %s107 = sphi 0, %s93
      %s111 = sphi 0, %s111
      %s113 = sphi 0, %s111
      %s114 = sphi 0, %s113
      %s128 = sphi 0, %s114
      %s132 = sphi 0, %s132
      %s134 = sphi 0, %s132
      %s135 = sphi 0, %s134
      %s149 = sphi 0, %s135
      %s153 = sphi 0, %s153
      %s155 = sphi 0, %s153
      %s156 = sphi 0, %s155
      %s170 = sphi 0, %s156
      %s176 = sphi 0, %s178
      %s179 = sphi 0, %s176
      %s180 = sphi 0, %s179
      %s196 = sphi 0, %s180
    $region4: #{salary_predictor_forward.1} parent=1 // loop_header_branch
      %17 = sbr.rel (%p15) target = $region8
    $region5: #{salary_predictor_forward.1} parent=1 // loop_body
      %s19 = ssub.s32 %s14, 1
      %s20 = ssub.s32 %s14, 2
      %s21 = sadd.s32 %s14, 1
      %s22 = ssub.s32 %s14, %s21
      %p23 = scmp.eq.s32.totalorder %s22, 0
      %s25 = sadd.s32 %s24, 1
      %s26 = scalar_select %p23, %s24, %s25
      %p29 = pneg %p23
      %p30 = scmp.eq.s32.totalorder %s14, 1
      %p31 = por %p29, %p30
      %p32 = scmp.ne.s32.totalorder %s24, %s27
      %p33 = scmp.eq.s32.totalorder %s14, 0
      %p34 = por %p32, %p33
      %p35 = scmp.ne.s32.totalorder %s24, %s27
      %p36 = scmp.eq.s32.totalorder %s19, 1
      %p37 = por %p35, %p36
      %p38 = scmp.ne.s32.totalorder %s27, %s28
      %p39 = scmp.eq.s32.totalorder %s19, 0
      %p40 = por %p38, %p39
      %p41 = scmp.ne.s32.totalorder %s27, %s28
      %p42 = scmp.eq.s32.totalorder %s20, 1
      %p43 = por %p41, %p42
      %p45 = scmp.ne.s32.totalorder %s28, %s44
      %p46 = scmp.eq.s32.totalorder %s20, 0
      %p47 = por %p45, %p46
      %s49 = sadd.s32 %s48, 1
      %p52 = scmp.eq.s32.totalorder %s14, 1
      %p53 = scmp.ne.s32.totalorder %s48, %s50
      %p54 = scmp.eq.s32.totalorder %s14, 0
      %p55 = por %p53, %p54
      %p56 = scmp.ne.s32.totalorder %s48, %s50
      %p57 = scmp.eq.s32.totalorder %s19, 1
      %p58 = por %p56, %p57
      %p59 = scmp.ne.s32.totalorder %s50, %s51
      %p60 = scmp.eq.s32.totalorder %s19, 0
      %p61 = por %p59, %p60
      %p62 = scmp.ne.s32.totalorder %s50, %s51
      %p63 = scmp.eq.s32.totalorder %s20, 1
      %p64 = por %p62, %p63
      %p66 = scmp.ne.s32.totalorder %s51, %s65
      %p67 = scmp.eq.s32.totalorder %s20, 0
      %p68 = por %p66, %p67
      %s70 = sadd.s32 %s69, 1
      %p73 = scmp.eq.s32.totalorder %s14, 1
      %p74 = scmp.ne.s32.totalorder %s69, %s71
      %p75 = scmp.eq.s32.totalorder %s14, 0
      %p76 = por %p74, %p75
      %p77 = scmp.ne.s32.totalorder %s69, %s71
      %p78 = scmp.eq.s32.totalorder %s19, 1
      %p79 = por %p77, %p78
      %p80 = scmp.ne.s32.totalorder %s71, %s72
      %p81 = scmp.eq.s32.totalorder %s19, 0
      %p82 = por %p80, %p81
      %p83 = scmp.ne.s32.totalorder %s71, %s72
      %p84 = scmp.eq.s32.totalorder %s20, 1
      %p85 = por %p83, %p84
      %p87 = scmp.ne.s32.totalorder %s72, %s86
      %p88 = scmp.eq.s32.totalorder %s20, 0
      %p89 = por %p87, %p88
      %s91 = sadd.s32 %s90, 1
      %p94 = scmp.eq.s32.totalorder %s14, 1
      %p95 = scmp.ne.s32.totalorder %s90, %s92
      %p96 = scmp.eq.s32.totalorder %s14, 0
      %p97 = por %p95, %p96
      %p98 = scmp.ne.s32.totalorder %s90, %s92
      %p99 = scmp.eq.s32.totalorder %s19, 1
      %p100 = por %p98, %p99
      %p101 = scmp.ne.s32.totalorder %s92, %s93
      %p102 = scmp.eq.s32.totalorder %s19, 0
      %p103 = por %p101, %p102
      %p104 = scmp.ne.s32.totalorder %s92, %s93
      %p105 = scmp.eq.s32.totalorder %s20, 1
      %p106 = por %p104, %p105
      %p108 = scmp.ne.s32.totalorder %s93, %s107
      %p109 = scmp.eq.s32.totalorder %s20, 0
      %p110 = por %p108, %p109
      %s112 = sadd.s32 %s111, 1
      %p115 = scmp.eq.s32.totalorder %s14, 1
      %p116 = scmp.ne.s32.totalorder %s111, %s113
      %p117 = scmp.eq.s32.totalorder %s14, 0
      %p118 = por %p116, %p117
      %p119 = scmp.ne.s32.totalorder %s111, %s113
      %p120 = scmp.eq.s32.totalorder %s19, 1
      %p121 = por %p119, %p120
      %p122 = scmp.ne.s32.totalorder %s113, %s114
      %p123 = scmp.eq.s32.totalorder %s19, 0
      %p124 = por %p122, %p123
      %p125 = scmp.ne.s32.totalorder %s113, %s114
      %p126 = scmp.eq.s32.totalorder %s20, 1
      %p127 = por %p125, %p126
      %p129 = scmp.ne.s32.totalorder %s114, %s128
      %p130 = scmp.eq.s32.totalorder %s20, 0
      %p131 = por %p129, %p130
      %s133 = sadd.s32 %s132, 1
      %p136 = scmp.eq.s32.totalorder %s14, 1
      %p137 = scmp.ne.s32.totalorder %s132, %s134
      %p138 = scmp.eq.s32.totalorder %s14, 0
      %p139 = por %p137, %p138
      %p140 = scmp.ne.s32.totalorder %s132, %s134
      %p141 = scmp.eq.s32.totalorder %s19, 1
      %p142 = por %p140, %p141
      %p143 = scmp.ne.s32.totalorder %s134, %s135
      %p144 = scmp.eq.s32.totalorder %s19, 0
      %p145 = por %p143, %p144
      %p146 = scmp.ne.s32.totalorder %s134, %s135
      %p147 = scmp.eq.s32.totalorder %s20, 1
      %p148 = por %p146, %p147
      %p150 = scmp.ne.s32.totalorder %s135, %s149
      %p151 = scmp.eq.s32.totalorder %s20, 0
      %p152 = por %p150, %p151
      %s154 = sadd.s32 %s153, 1
      %p157 = scmp.eq.s32.totalorder %s14, 1
      %p158 = scmp.ne.s32.totalorder %s153, %s155
      %p159 = scmp.eq.s32.totalorder %s14, 0
      %p160 = por %p158, %p159
      %p161 = scmp.ne.s32.totalorder %s153, %s155
      %p162 = scmp.eq.s32.totalorder %s19, 1
      %p163 = por %p161, %p162
      %p164 = scmp.ne.s32.totalorder %s155, %s156
      %p165 = scmp.eq.s32.totalorder %s19, 0
      %p166 = por %p164, %p165
      %p167 = scmp.ne.s32.totalorder %s155, %s156
      %p168 = scmp.eq.s32.totalorder %s20, 1
      %p169 = por %p167, %p168
      %p171 = scmp.ne.s32.totalorder %s156, %s170
      %p172 = scmp.eq.s32.totalorder %s20, 0
      %p173 = por %p171, %p172
      %s174 = ssub.s32 %s14, %s21
      %p175 = scmp.eq.s32.totalorder %s174, 0
      %s177 = sadd.s32 %s176, 1
      %s178 = scalar_select %p175, %s176, %s177
      %p181 = pneg %p175
      %p182 = scmp.eq.s32.totalorder %s14, 1
      %p183 = por %p181, %p182
      %p184 = scmp.ne.s32.totalorder %s176, %s179
      %p185 = scmp.eq.s32.totalorder %s14, 0
      %p186 = por %p184, %p185
      %p187 = scmp.ne.s32.totalorder %s176, %s179
      %p188 = scmp.eq.s32.totalorder %s19, 1
      %p189 = por %p187, %p188
      %p190 = scmp.ne.s32.totalorder %s179, %s180
      %p191 = scmp.eq.s32.totalorder %s19, 0
      %p192 = por %p190, %p191
      %p193 = scmp.ne.s32.totalorder %s179, %s180
      %p194 = scmp.eq.s32.totalorder %s20, 1
      %p195 = por %p193, %p194
      %p197 = scmp.ne.s32.totalorder %s180, %s196
      %p198 = scmp.eq.s32.totalorder %s20, 0
      %p199 = por %p197, %p198
      %p200 = scmp.le.s32.totalorder 1, %s14
      %p201 = scmp.lt.s32.totalorder %s14, 3
      %p202 = pnand %p200, %p201
      %p203 = pneg %p202
      // Predicated region
      $region9: #{salary_predictor_forward.1} parent=5 // pred_check
        _
      $region10: #{salary_predictor_forward.1} parent=5 // pred_check_branch
        %205 = sbr.rel (%p202) target = $region12
      $region11: #{salary_predictor_forward.1} parent=5 // pred_region
        %s206 = ssub.s32 %s14, 1
        // Predicated region
        $region13: #{salary_predictor_forward.1} parent=11 // pred_check
          %p207 = pneg %p61
        $region14: #{salary_predictor_forward.1} parent=11 // pred_check_branch
          %209 = sbr.rel (%p207) target = $region16
        $region15: #{salary_predictor_forward.1} parent=11 // pred_region
          _
        $region16: #{salary_predictor_forward.1} parent=11 // pred_fallthru
          _
        // Predicated region
        $region17: #{salary_predictor_forward.1} parent=11 // pred_check
          %p210 = pneg %p82
        $region18: #{salary_predictor_forward.1} parent=11 // pred_check_branch
          %212 = sbr.rel (%p210) target = $region20
        $region19: #{salary_predictor_forward.1} parent=11 // pred_region
          _
        $region20: #{salary_predictor_forward.1} parent=11 // pred_fallthru
          _
        // Predicated region
        $region21: #{salary_predictor_forward.1} parent=11 // pred_check
          %p213 = pneg %p103
        $region22: #{salary_predictor_forward.1} parent=11 // pred_check_branch
          %215 = sbr.rel (%p213) target = $region24
        $region23: #{salary_predictor_forward.1} parent=11 // pred_region
          _
        $region24: #{salary_predictor_forward.1} parent=11 // pred_fallthru
          _
        // Predicated region
        $region25: #{salary_predictor_forward.1} parent=11 // pred_check
          %p216 = pneg %p124
        $region26: #{salary_predictor_forward.1} parent=11 // pred_check_branch
          %218 = sbr.rel (%p216) target = $region28
        $region27: #{salary_predictor_forward.1} parent=11 // pred_region
          _
        $region28: #{salary_predictor_forward.1} parent=11 // pred_fallthru
          _
        // Predicated region
        $region29: #{salary_predictor_forward.1} parent=11 // pred_check
          %p219 = pneg %p145
        $region30: #{salary_predictor_forward.1} parent=11 // pred_check_branch
          %221 = sbr.rel (%p219) target = $region32
        $region31: #{salary_predictor_forward.1} parent=11 // pred_region
          _
        $region32: #{salary_predictor_forward.1} parent=11 // pred_fallthru
          _
        // Predicated region
        $region33: #{salary_predictor_forward.1} parent=11 // pred_check
          %p222 = pneg %p166
        $region34: #{salary_predictor_forward.1} parent=11 // pred_check_branch
          %224 = sbr.rel (%p222) target = $region36
        $region35: #{salary_predictor_forward.1} parent=11 // pred_region
          %s226 = ssub.s32 16, 16
          %227 = vsyncadd [#allocation3], %s226
          %s229 = sshll.u32 %s6, 4
          %s230 = int_to_ptr.vmem [resolvable:$true] %s229
          %232 = dma.vmem_to_smem %s230, 16, [#allocation2], [#allocation3]
        $region36: #{salary_predictor_forward.1} parent=11 // pred_fallthru
          _
      $region12: #{salary_predictor_forward.1} parent=5 // pred_fallthru
        _
      %p233 = scmp.lt.s32.totalorder %s14, 2
      // Predicated region
      $region37: #{salary_predictor_forward.1} parent=5 // pred_check
        %p234 = pneg %p233
      $region38: #{salary_predictor_forward.1} parent=5 // pred_check_branch
        %236 = sbr.rel (%p234) target = $region40
      $region39: #{salary_predictor_forward.1} parent=5 // pred_region
        // Predicated region
        $region41: #{salary_predictor_forward.1} parent=39 // pred_check
          %p237 = pneg %p34
        $region42: #{salary_predictor_forward.1} parent=39 // pred_check_branch
          %239 = sbr.rel (%p237) target = $region44
        $region43: #{salary_predictor_forward.1} parent=39 // pred_region
          %s240 = smul.u32 32, %s14
          %p241 = scmp.lt.s32.totalorder %s240, 63
          %s242 = scalar_select %p241, %s240, 63
          %s243 = smul.addr %s242, 4
          %s244 = scalar_lea.vmem %s0, %s243
          %s245 = smul.u32 32, %s14
        $region44: #{salary_predictor_forward.1} parent=39 // pred_fallthru
          _
      $region40: #{salary_predictor_forward.1} parent=5 // pred_fallthru
        _
      %p246 = scmp.le.s32.totalorder 1, %s14
      %p247 = scmp.lt.s32.totalorder %s14, 3
      %p248 = pnand %p246, %p247
      %p249 = pneg %p248
      // Predicated region
      $region45: #{salary_predictor_forward.1} parent=5 // pred_check
        _
      $region46: #{salary_predictor_forward.1} parent=5 // pred_check_branch
        %251 = sbr.rel (%p248) target = $region48
      $region47: #{salary_predictor_forward.1} parent=5 // pred_region
        %s252 = ssub.s32 %s14, 1
        // Predicated region
        $region49: #{salary_predictor_forward.1} parent=47 // pred_check
          %p253 = pneg %p166
        $region50: #{salary_predictor_forward.1} parent=47 // pred_check_branch
          %255 = sbr.rel (%p253) target = $region52
        $region51: #{salary_predictor_forward.1} parent=47 // pred_region
          %256 = dma.done [#allocation3], 16
        $region52: #{salary_predictor_forward.1} parent=47 // pred_fallthru
          _
        %257 = sfence
        %s258 = smul.u32 32, %s19
        %p259 = scmp.lt.s32.totalorder %s258, 63
        %s260 = scalar_select %p259, %s258, 63
        %s261 = smul.addr %s260, 4
        %s262 = scalar_lea.vmem %s0, %s261
        %p263 = pneg %p40
        %p264 = pneg %p37
        %p265 = pneg %p61
        %p266 = pneg %p58
        %p267 = pneg %p82
        %p268 = pneg %p79
        %p269 = pneg %p103
        %p270 = pneg %p100
        %p271 = pneg %p124
        %p272 = pneg %p121
        %p273 = pneg %p145
        %p274 = pneg %p142
        %p275 = pneg %p166
        %p276 = pneg %p163
        %p277 = pneg %p192
        %p278 = pneg %p189
        %p279 = scmp.lt.s32.totalorder %s19, 1
        %s280 = scalar_select %p279, %s19, 1
        %s281 = smul.addr %s280, 2
        %s282 = smul.addr %s281, 8
        %s283 = scalar_lea.vmem %s7, %s282
        %s284 = smul.u32 32, %s19
        %p285 = scmp.lt.s32.totalorder %s284, 63
        %s286 = scalar_select %p285, %s284, 63
        %s287 = smul.addr %s286, 4
        %s288 = scalar_lea.vmem %s0, %s287
        %s289 = smul.u32 32, %s19
        %p290 = scmp.lt.s32.totalorder %s19, 1
        %s291 = scalar_select %p290, %s19, 1
        %s292 = smul.addr %s291, 2
        %s293 = smul.addr %s292, 8
        %s294 = scalar_lea.vmem %s7, %s293
        %s296 = sld [smem:[#allocation2]]
        %s297 = sld [smem:[#allocation2 + $0x1]]
        %v298 = vld [vmem:[%s288] sm:$0xf]
        %v299 = vld [vmem:[%s288 + $0x4] sm:$0xf]
        %v300 = vld [vmem:[%s288 + $0x8] sm:$0xf]
        %v301 = vld [vmem:[%s288 + $0xc] sm:$0xf]
        %v302 = vld [vmem:[%s288 + $0x10] sm:$0xf]
        %v303 = vld [vmem:[%s288 + $0x14] sm:$0xf]
        %v304 = vld [vmem:[%s288 + $0x18] sm:$0xf]
        %v305 = vld [vmem:[%s288 + $0x1c] sm:$0xf]
        %v306 = vld [vmem:[%s288 + $0x20] sm:$0xf]
        %v307 = vld [vmem:[%s288 + $0x24] sm:$0xf]
        %v308 = vld [vmem:[%s288 + $0x28] sm:$0xf]
        %v309 = vld [vmem:[%s288 + $0x2c] sm:$0xf]
        %v310 = vld [vmem:[%s288 + $0x30] sm:$0xf]
        %v311 = vld [vmem:[%s288 + $0x34] sm:$0xf]
        %v312 = vld [vmem:[%s288 + $0x38] sm:$0xf]
        %v313 = vld [vmem:[%s288 + $0x3c] sm:$0xf]
        %v314 = vld [vmem:[%s288 + $0x40] sm:$0xf]
        %v315 = vld [vmem:[%s288 + $0x44] sm:$0xf]
        %v316 = vld [vmem:[%s288 + $0x48] sm:$0xf]
        %v317 = vld [vmem:[%s288 + $0x4c] sm:$0xf]
        %v318 = vld [vmem:[%s288 + $0x50] sm:$0xf]
        %v319 = vld [vmem:[%s288 + $0x54] sm:$0xf]
        %v320 = vld [vmem:[%s288 + $0x58] sm:$0xf]
        %v321 = vld [vmem:[%s288 + $0x5c] sm:$0xf]
        %v322 = vld [vmem:[%s288 + $0x60] sm:$0xf]
        %v323 = vld [vmem:[%s288 + $0x64] sm:$0xf]
        %v324 = vld [vmem:[%s288 + $0x68] sm:$0xf]
        %v325 = vld [vmem:[%s288 + $0x6c] sm:$0xf]
        %v326 = vld [vmem:[%s288 + $0x70] sm:$0xf]
        %v327 = vld [vmem:[%s288 + $0x74] sm:$0xf]
        %v328 = vld [vmem:[%s288 + $0x78] sm:$0xf]
        %v329 = vld [vmem:[%s288 + $0x7c] sm:$0xf]
        %v330 = vld [vmem:[%s1] sm:$0xff]
        %v331 = vld [vmem:[%s2] sm:$0x3]
        %v333 = vlaneseq
        %v334 = vshrl.u32 %v333, 7
        %v335 = vsub.s32 0, %v334
        %v336 = vrot.slane %v331, %v335
        %v337 = vlaneseq
        %v338 = vshrl.u32 %v337, 7
        %v339 = vsub.s32 1, %v338
        %v340 = vrot.slane %v331, %v339
        %v375 = vunpack.c.l.b16 %v298
        %v376 = vunpack.c.l.b16 %v299
        %v377 = vunpack.c.l.b16 %v300
        %v378 = vunpack.c.l.b16 %v301
        %v379 = vunpack.c.l.b16 %v302
        %v380 = vunpack.c.l.b16 %v303
        %v381 = vunpack.c.l.b16 %v304
        %v382 = vunpack.c.l.b16 %v305
        %v383 = vunpack.c.l.b16 %v306
        %v384 = vunpack.c.l.b16 %v307
        %v385 = vunpack.c.l.b16 %v308
        %v386 = vunpack.c.l.b16 %v309
        %v387 = vunpack.c.l.b16 %v310
        %v388 = vunpack.c.l.b16 %v311
        %v389 = vunpack.c.l.b16 %v312
        %v390 = vunpack.c.l.b16 %v313
        %v391 = vunpack.c.l.b16 %v314
        %v392 = vunpack.c.l.b16 %v315
        %v393 = vunpack.c.l.b16 %v316
        %v394 = vunpack.c.l.b16 %v317
        %v395 = vunpack.c.l.b16 %v318
        %v396 = vunpack.c.l.b16 %v319
        %v397 = vunpack.c.l.b16 %v320
        %v398 = vunpack.c.l.b16 %v321
        %v399 = vunpack.c.l.b16 %v322
        %v400 = vunpack.c.l.b16 %v323
        %v401 = vunpack.c.l.b16 %v324
        %v402 = vunpack.c.l.b16 %v325
        %v403 = vunpack.c.l.b16 %v326
        %v404 = vunpack.c.l.b16 %v327
        %v405 = vunpack.c.l.b16 %v328
        %v406 = vunpack.c.l.b16 %v329
        %v407 = vpack.c.b16 %v376, %v375
        %v408 = vpack.c.b16 %v378, %v377
        %v409 = vpack.c.b16 %v380, %v379
        %v410 = vpack.c.b16 %v382, %v381
        %v411 = vpack.c.b16 %v384, %v383
        %v412 = vpack.c.b16 %v386, %v385
        %v413 = vpack.c.b16 %v388, %v387
        %v414 = vpack.c.b16 %v390, %v389
        %v415 = vpack.c.b16 %v392, %v391
        %v416 = vpack.c.b16 %v394, %v393
        %v417 = vpack.c.b16 %v396, %v395
        %v418 = vpack.c.b16 %v398, %v397
        %v419 = vpack.c.b16 %v400, %v399
        %v420 = vpack.c.b16 %v402, %v401
        %v421 = vpack.c.b16 %v404, %v403
        %v422 = vpack.c.b16 %v406, %v405
        %v424 = vunpack.c.l.b16 %v330
        %v425 = vunpack.c.h.b16 %v330
        %v426 = vpack.c.b16 %v424, %v424
        %v427 = vpack.c.b16 %v425, %v425
        %vm428 = vcmask 64512
        %v430 = vsel %vm428, %v407, 0
        %v433 = vsel %vm428, %v408, 0
        %v436 = vsel %vm428, %v409, 0
        %v439 = vsel %vm428, %v410, 0
        %v442 = vsel %vm428, %v411, 0
        %v445 = vsel %vm428, %v412, 0
        %v448 = vsel %vm428, %v413, 0
        %v451 = vsel %vm428, %v414, 0
        %v454 = vsel %vm428, %v415, 0
        %v457 = vsel %vm428, %v416, 0
        %v460 = vsel %vm428, %v417, 0
        %v463 = vsel %vm428, %v418, 0
        %v466 = vsel %vm428, %v419, 0
        %v469 = vsel %vm428, %v420, 0
        %v472 = vsel %vm428, %v421, 0
        %v475 = vsel %vm428, %v422, 0
        %vm477 = vcmask 1043456
        %v479 = vsel %vm477, %v426, 0
        %v482 = vsel %vm477, %v427, 0
        %484 = vmatprep.subr.bf16.mxu0 0
        %485 = vmatpush1.bf16.msra.mxu0 0
        %486 = vmatprep.subr.bf16.mxu0 0
        %487 = vmatpush1.bf16.msra.mxu0 0
        %488 = vmatprep.subr.bf16.mxu0 0
        %489 = vmatpush1.bf16.msra.mxu0 0
        %490 = vmatprep.subr.bf16.mxu0 0
        %491 = vmatpush1.bf16.msra.mxu0 0
        %492 = vmatprep.subr.bf16.mxu0 0
        %493 = vmatpush1.bf16.msra.mxu0 0
        %494 = vmatprep.subr.bf16.mxu0 0
        %495 = vmatpush1.bf16.msra.mxu0 0
        %496 = vmatprep.subr.bf16.mxu0 0
        %497 = vmatpush1.bf16.msra.mxu0 0
        %498 = vmatprep.subr.bf16.mxu0 %v482
        %499 = vmatpush1.bf16.msra.mxu0 %v479
        %500 = vmatprep.subr.bf16.mxu0 0
        %501 = vmatpush2.bf16.msra.mxu0 0
        %502 = vmatprep.subr.bf16.mxu0 0
        %503 = vmatpush2.bf16.msra.mxu0 0
        %504 = vmatprep.subr.bf16.mxu0 0
        %505 = vmatpush2.bf16.msra.mxu0 0
        %506 = vmatprep.subr.bf16.mxu0 0
        %507 = vmatpush2.bf16.msra.mxu0 0
        %508 = vmatprep.subr.bf16.mxu0 0
        %509 = vmatpush2.bf16.msra.mxu0 0
        %510 = vmatprep.subr.bf16.mxu0 0
        %511 = vmatpush2.bf16.msra.mxu0 0
        %512 = vmatprep.subr.bf16.mxu0 0
        %513 = vmatpush2.bf16.msra.mxu0 0
        %514 = vmatprep.subr.bf16.mxu0 0
        %515 = vmatpush2.bf16.msra.mxu0 0
        %516 = vmatprep.mubr.bf16.mxu0 0
        %517 = vmatmul.mubr.bf16.gmra.mxu0 %v430
        %v518 = vpop.f32.mrf.mxu0
        %v519 = vadd.f32 %v336, %v518
        %v520 = vpop.f32.mrf.mxu0
        %v521 = vadd.f32 %v340, %v520
        %v522 = vpop.f32.mrf.mxu0
        %v523 = vadd.f32 %v336, %v522
        %v524 = vpop.f32.mrf.mxu0
        %v525 = vadd.f32 %v340, %v524
        %526 = vmatprep.mubr.bf16.mxu0 0
        %527 = vmatmul.mubr.bf16.gmra.mxu0 %v433
        %v528 = vpop.f32.mrf.mxu0
        %v529 = vadd.f32 %v336, %v528
        %v530 = vpop.f32.mrf.mxu0
        %v531 = vadd.f32 %v340, %v530
        %v532 = vpop.f32.mrf.mxu0
        %v533 = vadd.f32 %v336, %v532
        %v534 = vpop.f32.mrf.mxu0
        %v535 = vadd.f32 %v340, %v534
        %536 = vmatprep.mubr.bf16.mxu0 0
        %537 = vmatmul.mubr.bf16.gmra.mxu0 %v436
        %v538 = vpop.f32.mrf.mxu0
        %v539 = vadd.f32 %v336, %v538
        %v540 = vpop.f32.mrf.mxu0
        %v541 = vadd.f32 %v340, %v540
        %v542 = vpop.f32.mrf.mxu0
        %v543 = vadd.f32 %v336, %v542
        %v544 = vpop.f32.mrf.mxu0
        %v545 = vadd.f32 %v340, %v544
        %546 = vmatprep.mubr.bf16.mxu0 0
        %547 = vmatmul.mubr.bf16.gmra.mxu0 %v439
        %v548 = vpop.f32.mrf.mxu0
        %v549 = vadd.f32 %v336, %v548
        %v550 = vpop.f32.mrf.mxu0
        %v551 = vadd.f32 %v340, %v550
        %v552 = vpop.f32.mrf.mxu0
        %v553 = vadd.f32 %v336, %v552
        %v554 = vpop.f32.mrf.mxu0
        %v555 = vadd.f32 %v340, %v554
        %556 = vmatprep.mubr.bf16.mxu0 0
        %557 = vmatmul.mubr.bf16.gmra.mxu0 %v442
        %v558 = vpop.f32.mrf.mxu0
        %v559 = vadd.f32 %v336, %v558
        %v560 = vpop.f32.mrf.mxu0
        %v561 = vadd.f32 %v340, %v560
        %v562 = vpop.f32.mrf.mxu0
        %v563 = vadd.f32 %v336, %v562
        %v564 = vpop.f32.mrf.mxu0
        %v565 = vadd.f32 %v340, %v564
        %566 = vmatprep.mubr.bf16.mxu0 0
        %567 = vmatmul.mubr.bf16.gmra.mxu0 %v445
        %v568 = vpop.f32.mrf.mxu0
        %v569 = vadd.f32 %v336, %v568
        %v570 = vpop.f32.mrf.mxu0
        %v571 = vadd.f32 %v340, %v570
        %v572 = vpop.f32.mrf.mxu0
        %v573 = vadd.f32 %v336, %v572
        %v574 = vpop.f32.mrf.mxu0
        %v575 = vadd.f32 %v340, %v574
        %576 = vmatprep.mubr.bf16.mxu0 0
        %577 = vmatmul.mubr.bf16.gmra.mxu0 %v448
        %v578 = vpop.f32.mrf.mxu0
        %v579 = vadd.f32 %v336, %v578
        %v580 = vpop.f32.mrf.mxu0
        %v581 = vadd.f32 %v340, %v580
        %v582 = vpop.f32.mrf.mxu0
        %v583 = vadd.f32 %v336, %v582
        %v584 = vpop.f32.mrf.mxu0
        %v585 = vadd.f32 %v340, %v584
        %586 = vmatprep.mubr.bf16.mxu0 0
        %587 = vmatmul.mubr.bf16.gmra.mxu0 %v451
        %v588 = vpop.f32.mrf.mxu0
        %v589 = vadd.f32 %v336, %v588
        %v590 = vpop.f32.mrf.mxu0
        %v591 = vadd.f32 %v340, %v590
        %v592 = vpop.f32.mrf.mxu0
        %v593 = vadd.f32 %v336, %v592
        %v594 = vpop.f32.mrf.mxu0
        %v595 = vadd.f32 %v340, %v594
        %596 = vmatprep.mubr.bf16.mxu0 0
        %597 = vmatmul.mubr.bf16.gmra.mxu0 %v454
        %v598 = vpop.f32.mrf.mxu0
        %v599 = vadd.f32 %v336, %v598
        %v600 = vpop.f32.mrf.mxu0
        %v601 = vadd.f32 %v340, %v600
        %v602 = vpop.f32.mrf.mxu0
        %v603 = vadd.f32 %v336, %v602
        %v604 = vpop.f32.mrf.mxu0
        %v605 = vadd.f32 %v340, %v604
        %606 = vmatprep.mubr.bf16.mxu0 0
        %607 = vmatmul.mubr.bf16.gmra.mxu0 %v457
        %v608 = vpop.f32.mrf.mxu0
        %v609 = vadd.f32 %v336, %v608
        %v610 = vpop.f32.mrf.mxu0
        %v611 = vadd.f32 %v340, %v610
        %v612 = vpop.f32.mrf.mxu0
        %v613 = vadd.f32 %v336, %v612
        %v614 = vpop.f32.mrf.mxu0
        %v615 = vadd.f32 %v340, %v614
        %616 = vmatprep.mubr.bf16.mxu0 0
        %617 = vmatmul.mubr.bf16.gmra.mxu0 %v460
        %v618 = vpop.f32.mrf.mxu0
        %v619 = vadd.f32 %v336, %v618
        %v620 = vpop.f32.mrf.mxu0
        %v621 = vadd.f32 %v340, %v620
        %v622 = vpop.f32.mrf.mxu0
        %v623 = vadd.f32 %v336, %v622
        %v624 = vpop.f32.mrf.mxu0
        %v625 = vadd.f32 %v340, %v624
        %626 = vmatprep.mubr.bf16.mxu0 0
        %627 = vmatmul.mubr.bf16.gmra.mxu0 %v463
        %v628 = vpop.f32.mrf.mxu0
        %v629 = vadd.f32 %v336, %v628
        %v630 = vpop.f32.mrf.mxu0
        %v631 = vadd.f32 %v340, %v630
        %v632 = vpop.f32.mrf.mxu0
        %v633 = vadd.f32 %v336, %v632
        %v634 = vpop.f32.mrf.mxu0
        %v635 = vadd.f32 %v340, %v634
        %636 = vmatprep.mubr.bf16.mxu0 0
        %637 = vmatmul.mubr.bf16.gmra.mxu0 %v466
        %v638 = vpop.f32.mrf.mxu0
        %v639 = vadd.f32 %v336, %v638
        %v640 = vpop.f32.mrf.mxu0
        %v641 = vadd.f32 %v340, %v640
        %v642 = vpop.f32.mrf.mxu0
        %v643 = vadd.f32 %v336, %v642
        %v644 = vpop.f32.mrf.mxu0
        %v645 = vadd.f32 %v340, %v644
        %646 = vmatprep.mubr.bf16.mxu0 0
        %647 = vmatmul.mubr.bf16.gmra.mxu0 %v469
        %v648 = vpop.f32.mrf.mxu0
        %v649 = vadd.f32 %v336, %v648
        %v650 = vpop.f32.mrf.mxu0
        %v651 = vadd.f32 %v340, %v650
        %v652 = vpop.f32.mrf.mxu0
        %v653 = vadd.f32 %v336, %v652
        %v654 = vpop.f32.mrf.mxu0
        %v655 = vadd.f32 %v340, %v654
        %656 = vmatprep.mubr.bf16.mxu0 0
        %657 = vmatmul.mubr.bf16.gmra.mxu0 %v472
        %v658 = vpop.f32.mrf.mxu0
        %v659 = vadd.f32 %v336, %v658
        %v660 = vpop.f32.mrf.mxu0
        %v661 = vadd.f32 %v340, %v660
        %v662 = vpop.f32.mrf.mxu0
        %v663 = vadd.f32 %v336, %v662
        %v664 = vpop.f32.mrf.mxu0
        %v665 = vadd.f32 %v340, %v664
        %666 = vmatprep.mubr.bf16.mxu0 0
        %667 = vmatmul.mubr.bf16.gmra.mxu0 %v475
        %v668 = vpop.f32.mrf.mxu0
        %v669 = vadd.f32 %v336, %v668
        %v670 = vpop.f32.mrf.mxu0
        %v671 = vadd.f32 %v340, %v670
        %v672 = vpop.f32.mrf.mxu0
        %v673 = vadd.f32 %v336, %v672
        %v674 = vpop.f32.mrf.mxu0
        %v675 = vadd.f32 %v340, %v674
        %676 = vdwg.mxu0
        %v677 = vmax.f32 %v519, 0.0
        %v678 = vmax.f32 %v521, 0.0
        %v679 = vmax.f32 %v523, 0.0
        %v680 = vmax.f32 %v525, 0.0
        %v681 = vmax.f32 %v529, 0.0
        %v682 = vmax.f32 %v531, 0.0
        %v683 = vmax.f32 %v533, 0.0
        %v684 = vmax.f32 %v535, 0.0
        %v685 = vmax.f32 %v539, 0.0
        %v686 = vmax.f32 %v541, 0.0
        %v687 = vmax.f32 %v543, 0.0
        %v688 = vmax.f32 %v545, 0.0
        %v689 = vmax.f32 %v549, 0.0
        %v690 = vmax.f32 %v551, 0.0
        %v691 = vmax.f32 %v553, 0.0
        %v692 = vmax.f32 %v555, 0.0
        %v693 = vmax.f32 %v559, 0.0
        %v694 = vmax.f32 %v561, 0.0
        %v695 = vmax.f32 %v563, 0.0
        %v696 = vmax.f32 %v565, 0.0
        %v697 = vmax.f32 %v569, 0.0
        %v698 = vmax.f32 %v571, 0.0
        %v699 = vmax.f32 %v573, 0.0
        %v700 = vmax.f32 %v575, 0.0
        %v701 = vmax.f32 %v579, 0.0
        %v702 = vmax.f32 %v581, 0.0
        %v703 = vmax.f32 %v583, 0.0
        %v704 = vmax.f32 %v585, 0.0
        %v705 = vmax.f32 %v589, 0.0
        %v706 = vmax.f32 %v591, 0.0
        %v707 = vmax.f32 %v593, 0.0
        %v708 = vmax.f32 %v595, 0.0
        %v709 = vmax.f32 %v599, 0.0
        %v710 = vmax.f32 %v601, 0.0
        %v711 = vmax.f32 %v603, 0.0
        %v712 = vmax.f32 %v605, 0.0
        %v713 = vmax.f32 %v609, 0.0
        %v714 = vmax.f32 %v611, 0.0
        %v715 = vmax.f32 %v613, 0.0
        %v716 = vmax.f32 %v615, 0.0
        %v717 = vmax.f32 %v619, 0.0
        %v718 = vmax.f32 %v621, 0.0
        %v719 = vmax.f32 %v623, 0.0
        %v720 = vmax.f32 %v625, 0.0
        %v721 = vmax.f32 %v629, 0.0
        %v722 = vmax.f32 %v631, 0.0
        %v723 = vmax.f32 %v633, 0.0
        %v724 = vmax.f32 %v635, 0.0
        %v725 = vmax.f32 %v639, 0.0
        %v726 = vmax.f32 %v641, 0.0
        %v727 = vmax.f32 %v643, 0.0
        %v728 = vmax.f32 %v645, 0.0
        %v729 = vmax.f32 %v649, 0.0
        %v730 = vmax.f32 %v651, 0.0
        %v731 = vmax.f32 %v653, 0.0
        %v732 = vmax.f32 %v655, 0.0
        %v733 = vmax.f32 %v659, 0.0
        %v734 = vmax.f32 %v661, 0.0
        %v735 = vmax.f32 %v663, 0.0
        %v736 = vmax.f32 %v665, 0.0
        %v737 = vmax.f32 %v669, 0.0
        %v738 = vmax.f32 %v671, 0.0
        %v739 = vmax.f32 %v673, 0.0
        %v740 = vmax.f32 %v675, 0.0
        %v741 = vpack.c.bf16 %v679, %v677
        %v742 = vpack.c.bf16 %v680, %v678
        %v743 = vpack.c.bf16 %v683, %v681
        %v744 = vpack.c.bf16 %v684, %v682
        %v745 = vpack.c.bf16 %v687, %v685
        %v746 = vpack.c.bf16 %v688, %v686
        %v747 = vpack.c.bf16 %v691, %v689
        %v748 = vpack.c.bf16 %v692, %v690
        %v749 = vpack.c.bf16 %v695, %v693
        %v750 = vpack.c.bf16 %v696, %v694
        %v751 = vpack.c.bf16 %v699, %v697
        %v752 = vpack.c.bf16 %v700, %v698
        %v753 = vpack.c.bf16 %v703, %v701
        %v754 = vpack.c.bf16 %v704, %v702
        %v755 = vpack.c.bf16 %v707, %v705
        %v756 = vpack.c.bf16 %v708, %v706
        %v757 = vpack.c.bf16 %v711, %v709
        %v758 = vpack.c.bf16 %v712, %v710
        %v759 = vpack.c.bf16 %v715, %v713
        %v760 = vpack.c.bf16 %v716, %v714
        %v761 = vpack.c.bf16 %v719, %v717
        %v762 = vpack.c.bf16 %v720, %v718
        %v763 = vpack.c.bf16 %v723, %v721
        %v764 = vpack.c.bf16 %v724, %v722
        %v765 = vpack.c.bf16 %v727, %v725
        %v766 = vpack.c.bf16 %v728, %v726
        %v767 = vpack.c.bf16 %v731, %v729
        %v768 = vpack.c.bf16 %v732, %v730
        %v769 = vpack.c.bf16 %v735, %v733
        %v770 = vpack.c.bf16 %v736, %v734
        %v771 = vpack.c.bf16 %v739, %v737
        %v772 = vpack.c.bf16 %v740, %v738
        %v773 = vld [vmem:[%s3] sm:$0xf]
        %v774 = vld [vmem:[%s3 + $0x4] sm:$0xf]
        %v775 = vld [vmem:[%s3 + $0x8] sm:$0xf]
        %v776 = vld [vmem:[%s3 + $0xc] sm:$0xf]
        %v777 = vld [vmem:[%s3 + $0x10] sm:$0xf]
        %v778 = vld [vmem:[%s3 + $0x14] sm:$0xf]
        %v779 = vld [vmem:[%s3 + $0x18] sm:$0xf]
        %v780 = vld [vmem:[%s3 + $0x1c] sm:$0xf]
        %v781 = vld [vmem:[%s3 + $0x20] sm:$0xf]
        %v782 = vld [vmem:[%s3 + $0x24] sm:$0xf]
        %v783 = vld [vmem:[%s3 + $0x28] sm:$0xf]
        %v784 = vld [vmem:[%s3 + $0x2c] sm:$0xf]
        %v785 = vld [vmem:[%s3 + $0x30] sm:$0xf]
        %v786 = vld [vmem:[%s3 + $0x34] sm:$0xf]
        %v787 = vld [vmem:[%s3 + $0x38] sm:$0xf]
        %v788 = vld [vmem:[%s3 + $0x3c] sm:$0xf]
        %v789 = vld [vmem:[%s3 + $0x40] sm:$0xf]
        %v790 = vld [vmem:[%s3 + $0x44] sm:$0xf]
        %v791 = vld [vmem:[%s3 + $0x48] sm:$0xf]
        %v792 = vld [vmem:[%s3 + $0x4c] sm:$0xf]
        %v793 = vld [vmem:[%s3 + $0x50] sm:$0xf]
        %v794 = vld [vmem:[%s3 + $0x54] sm:$0xf]
        %v795 = vld [vmem:[%s3 + $0x58] sm:$0xf]
        %v796 = vld [vmem:[%s3 + $0x5c] sm:$0xf]
        %v797 = vld [vmem:[%s3 + $0x60] sm:$0xf]
        %v798 = vld [vmem:[%s3 + $0x64] sm:$0xf]
        %v799 = vld [vmem:[%s3 + $0x68] sm:$0xf]
        %v800 = vld [vmem:[%s3 + $0x6c] sm:$0xf]
        %v801 = vld [vmem:[%s3 + $0x70] sm:$0xf]
        %v802 = vld [vmem:[%s3 + $0x74] sm:$0xf]
        %v803 = vld [vmem:[%s3 + $0x78] sm:$0xf]
        %v804 = vld [vmem:[%s3 + $0x7c] sm:$0xf]
        %v805 = vld [vmem:[%s4] sm:$0x1]
        %v807 = vlaneseq
        %v808 = vshrl.u32 %v807, 7
        %v809 = vsub.s32 0, %v808
        %v810 = vrot.slane %v805, %v809
        %v844 = vunpack.c.l.b16 %v773
        %v845 = vunpack.c.l.b16 %v774
        %v846 = vunpack.c.l.b16 %v775
        %v847 = vunpack.c.l.b16 %v776
        %v848 = vunpack.c.l.b16 %v777
        %v849 = vunpack.c.l.b16 %v778
        %v850 = vunpack.c.l.b16 %v779
        %v851 = vunpack.c.l.b16 %v780
        %v852 = vunpack.c.l.b16 %v781
        %v853 = vunpack.c.l.b16 %v782
        %v854 = vunpack.c.l.b16 %v783
        %v855 = vunpack.c.l.b16 %v784
        %v856 = vunpack.c.l.b16 %v785
        %v857 = vunpack.c.l.b16 %v786
        %v858 = vunpack.c.l.b16 %v787
        %v859 = vunpack.c.l.b16 %v788
        %v860 = vunpack.c.l.b16 %v789
        %v861 = vunpack.c.l.b16 %v790
        %v862 = vunpack.c.l.b16 %v791
        %v863 = vunpack.c.l.b16 %v792
        %v864 = vunpack.c.l.b16 %v793
        %v865 = vunpack.c.l.b16 %v794
        %v866 = vunpack.c.l.b16 %v795
        %v867 = vunpack.c.l.b16 %v796
        %v868 = vunpack.c.l.b16 %v797
        %v869 = vunpack.c.l.b16 %v798
        %v870 = vunpack.c.l.b16 %v799
        %v871 = vunpack.c.l.b16 %v800
        %v872 = vunpack.c.l.b16 %v801
        %v873 = vunpack.c.l.b16 %v802
        %v874 = vunpack.c.l.b16 %v803
        %v875 = vunpack.c.l.b16 %v804
        %v876 = vpack.c.b16 %v845, %v844
        %v877 = vpack.c.b16 %v847, %v846
        %v878 = vpack.c.b16 %v849, %v848
        %v879 = vpack.c.b16 %v851, %v850
        %v880 = vpack.c.b16 %v853, %v852
        %v881 = vpack.c.b16 %v855, %v854
        %v882 = vpack.c.b16 %v857, %v856
        %v883 = vpack.c.b16 %v859, %v858
        %v884 = vpack.c.b16 %v861, %v860
        %v885 = vpack.c.b16 %v863, %v862
        %v886 = vpack.c.b16 %v865, %v864
        %v887 = vpack.c.b16 %v867, %v866
        %v888 = vpack.c.b16 %v869, %v868
        %v889 = vpack.c.b16 %v871, %v870
        %v890 = vpack.c.b16 %v873, %v872
        %v891 = vpack.c.b16 %v875, %v874
        %908 = vmatprep.subr.bf16.mxu0 0
        %909 = vmatpush1.bf16.msra.mxu0 %v883
        %910 = vmatprep.subr.bf16.mxu0 0
        %911 = vmatpush1.bf16.msra.mxu0 %v882
        %912 = vmatprep.subr.bf16.mxu0 0
        %913 = vmatpush1.bf16.msra.mxu0 %v881
        %914 = vmatprep.subr.bf16.mxu0 0
        %915 = vmatpush1.bf16.msra.mxu0 %v880
        %916 = vmatprep.subr.bf16.mxu0 0
        %917 = vmatpush1.bf16.msra.mxu0 %v879
        %918 = vmatprep.subr.bf16.mxu0 0
        %919 = vmatpush1.bf16.msra.mxu0 %v878
        %920 = vmatprep.subr.bf16.mxu0 0
        %921 = vmatpush1.bf16.msra.mxu0 %v877
        %922 = vmatprep.subr.bf16.mxu0 0
        %923 = vmatpush1.bf16.msra.mxu0 %v876
        %924 = vmatprep.subr.bf16.mxu0 0
        %925 = vmatpush2.bf16.msra.mxu0 %v891
        %926 = vmatprep.subr.bf16.mxu0 0
        %927 = vmatpush2.bf16.msra.mxu0 %v890
        %928 = vmatprep.subr.bf16.mxu0 0
        %929 = vmatpush2.bf16.msra.mxu0 %v889
        %930 = vmatprep.subr.bf16.mxu0 0
        %931 = vmatpush2.bf16.msra.mxu0 %v888
        %932 = vmatprep.subr.bf16.mxu0 0
        %933 = vmatpush2.bf16.msra.mxu0 %v887
        %934 = vmatprep.subr.bf16.mxu0 0
        %935 = vmatpush2.bf16.msra.mxu0 %v886
        %936 = vmatprep.subr.bf16.mxu0 0
        %937 = vmatpush2.bf16.msra.mxu0 %v885
        %938 = vmatprep.subr.bf16.mxu0 0
        %939 = vmatpush2.bf16.msra.mxu0 %v884
        %940 = vmatprep.mubr.bf16.mxu0 %v742
        %941 = vmatmul.mubr.bf16.gmra.mxu0 %v741
        %v942 = vpop.f32.mrf.mxu0
        %v943 = vadd.f32 %v810, %v942
        %v944 = vpop.f32.mrf.mxu0
        %v945 = vpop.f32.mrf.mxu0
        %v946 = vadd.f32 %v810, %v945
        %v947 = vpop.f32.mrf.mxu0
        %948 = vmatprep.mubr.bf16.mxu0 %v744
        %949 = vmatmul.mubr.bf16.gmra.mxu0 %v743
        %v950 = vpop.f32.mrf.mxu0
        %v951 = vadd.f32 %v810, %v950
        %v952 = vpop.f32.mrf.mxu0
        %v953 = vpop.f32.mrf.mxu0
        %v954 = vadd.f32 %v810, %v953
        %v955 = vpop.f32.mrf.mxu0
        %956 = vmatprep.mubr.bf16.mxu0 %v746
        %957 = vmatmul.mubr.bf16.gmra.mxu0 %v745
        %v958 = vpop.f32.mrf.mxu0
        %v959 = vadd.f32 %v810, %v958
        %v960 = vpop.f32.mrf.mxu0
        %v961 = vpop.f32.mrf.mxu0
        %v962 = vadd.f32 %v810, %v961
        %v963 = vpop.f32.mrf.mxu0
        %964 = vmatprep.mubr.bf16.mxu0 %v748
        %965 = vmatmul.mubr.bf16.gmra.mxu0 %v747
        %v966 = vpop.f32.mrf.mxu0
        %v967 = vadd.f32 %v810, %v966
        %v968 = vpop.f32.mrf.mxu0
        %v969 = vpop.f32.mrf.mxu0
        %v970 = vadd.f32 %v810, %v969
        %v971 = vpop.f32.mrf.mxu0
        %972 = vmatprep.mubr.bf16.mxu0 %v750
        %973 = vmatmul.mubr.bf16.gmra.mxu0 %v749
        %v974 = vpop.f32.mrf.mxu0
        %v975 = vadd.f32 %v810, %v974
        %v976 = vpop.f32.mrf.mxu0
        %v977 = vpop.f32.mrf.mxu0
        %v978 = vadd.f32 %v810, %v977
        %v979 = vpop.f32.mrf.mxu0
        %980 = vmatprep.mubr.bf16.mxu0 %v752
        %981 = vmatmul.mubr.bf16.gmra.mxu0 %v751
        %v982 = vpop.f32.mrf.mxu0
        %v983 = vadd.f32 %v810, %v982
        %v984 = vpop.f32.mrf.mxu0
        %v985 = vpop.f32.mrf.mxu0
        %v986 = vadd.f32 %v810, %v985
        %v987 = vpop.f32.mrf.mxu0
        %988 = vmatprep.mubr.bf16.mxu0 %v754
        %989 = vmatmul.mubr.bf16.gmra.mxu0 %v753
        %v990 = vpop.f32.mrf.mxu0
        %v991 = vadd.f32 %v810, %v990
        %v992 = vpop.f32.mrf.mxu0
        %v993 = vpop.f32.mrf.mxu0
        %v994 = vadd.f32 %v810, %v993
        %v995 = vpop.f32.mrf.mxu0
        %996 = vmatprep.mubr.bf16.mxu0 %v756
        %997 = vmatmul.mubr.bf16.gmra.mxu0 %v755
        %v998 = vpop.f32.mrf.mxu0
        %v999 = vadd.f32 %v810, %v998
        %v1000 = vpop.f32.mrf.mxu0
        %v1001 = vpop.f32.mrf.mxu0
        %v1002 = vadd.f32 %v810, %v1001
        %v1003 = vpop.f32.mrf.mxu0
        %1004 = vmatprep.mubr.bf16.mxu0 %v758
        %1005 = vmatmul.mubr.bf16.gmra.mxu0 %v757
        %v1006 = vpop.f32.mrf.mxu0
        %v1007 = vadd.f32 %v810, %v1006
        %v1008 = vpop.f32.mrf.mxu0
        %v1009 = vpop.f32.mrf.mxu0
        %v1010 = vadd.f32 %v810, %v1009
        %v1011 = vpop.f32.mrf.mxu0
        %1012 = vmatprep.mubr.bf16.mxu0 %v760
        %1013 = vmatmul.mubr.bf16.gmra.mxu0 %v759
        %v1014 = vpop.f32.mrf.mxu0
        %v1015 = vadd.f32 %v810, %v1014
        %v1016 = vpop.f32.mrf.mxu0
        %v1017 = vpop.f32.mrf.mxu0
        %v1018 = vadd.f32 %v810, %v1017
        %v1019 = vpop.f32.mrf.mxu0
        %1020 = vmatprep.mubr.bf16.mxu0 %v762
        %1021 = vmatmul.mubr.bf16.gmra.mxu0 %v761
        %v1022 = vpop.f32.mrf.mxu0
        %v1023 = vadd.f32 %v810, %v1022
        %v1024 = vpop.f32.mrf.mxu0
        %v1025 = vpop.f32.mrf.mxu0
        %v1026 = vadd.f32 %v810, %v1025
        %v1027 = vpop.f32.mrf.mxu0
        %1028 = vmatprep.mubr.bf16.mxu0 %v764
        %1029 = vmatmul.mubr.bf16.gmra.mxu0 %v763
        %v1030 = vpop.f32.mrf.mxu0
        %v1031 = vadd.f32 %v810, %v1030
        %v1032 = vpop.f32.mrf.mxu0
        %v1033 = vpop.f32.mrf.mxu0
        %v1034 = vadd.f32 %v810, %v1033
        %v1035 = vpop.f32.mrf.mxu0
        %1036 = vmatprep.mubr.bf16.mxu0 %v766
        %1037 = vmatmul.mubr.bf16.gmra.mxu0 %v765
        %v1038 = vpop.f32.mrf.mxu0
        %v1039 = vadd.f32 %v810, %v1038
        %v1040 = vpop.f32.mrf.mxu0
        %v1041 = vpop.f32.mrf.mxu0
        %v1042 = vadd.f32 %v810, %v1041
        %v1043 = vpop.f32.mrf.mxu0
        %1044 = vmatprep.mubr.bf16.mxu0 %v768
        %1045 = vmatmul.mubr.bf16.gmra.mxu0 %v767
        %v1046 = vpop.f32.mrf.mxu0
        %v1047 = vadd.f32 %v810, %v1046
        %v1048 = vpop.f32.mrf.mxu0
        %v1049 = vpop.f32.mrf.mxu0
        %v1050 = vadd.f32 %v810, %v1049
        %v1051 = vpop.f32.mrf.mxu0
        %1052 = vmatprep.mubr.bf16.mxu0 %v770
        %1053 = vmatmul.mubr.bf16.gmra.mxu0 %v769
        %v1054 = vpop.f32.mrf.mxu0
        %v1055 = vadd.f32 %v810, %v1054
        %v1056 = vpop.f32.mrf.mxu0
        %v1057 = vpop.f32.mrf.mxu0
        %v1058 = vadd.f32 %v810, %v1057
        %v1059 = vpop.f32.mrf.mxu0
        %1060 = vmatprep.mubr.bf16.mxu0 %v772
        %1061 = vmatmul.mubr.bf16.gmra.mxu0 %v771
        %v1062 = vpop.f32.mrf.mxu0
        %v1063 = vadd.f32 %v810, %v1062
        %v1064 = vpop.f32.mrf.mxu0
        %v1065 = vpop.f32.mrf.mxu0
        %v1066 = vadd.f32 %v810, %v1065
        %v1067 = vpop.f32.mrf.mxu0
        %1068 = vdwg.mxu0
        %vm1069 = vcmp.ge.f32.partialorder %v943, 0.0
        %vm1070 = vcmp.ge.f32.partialorder %v946, 0.0
        %vm1071 = vcmp.ge.f32.partialorder %v951, 0.0
        %vm1072 = vcmp.ge.f32.partialorder %v954, 0.0
        %vm1073 = vcmp.ge.f32.partialorder %v959, 0.0
        %vm1074 = vcmp.ge.f32.partialorder %v962, 0.0
        %vm1075 = vcmp.ge.f32.partialorder %v967, 0.0
        %vm1076 = vcmp.ge.f32.partialorder %v970, 0.0
        %vm1077 = vcmp.ge.f32.partialorder %v975, 0.0
        %vm1078 = vcmp.ge.f32.partialorder %v978, 0.0
        %vm1079 = vcmp.ge.f32.partialorder %v983, 0.0
        %vm1080 = vcmp.ge.f32.partialorder %v986, 0.0
        %vm1081 = vcmp.ge.f32.partialorder %v991, 0.0
        %vm1082 = vcmp.ge.f32.partialorder %v994, 0.0
        %vm1083 = vcmp.ge.f32.partialorder %v999, 0.0
        %vm1084 = vcmp.ge.f32.partialorder %v1002, 0.0
        %vm1085 = vcmp.ge.f32.partialorder %v1007, 0.0
        %vm1086 = vcmp.ge.f32.partialorder %v1010, 0.0
        %vm1087 = vcmp.ge.f32.partialorder %v1015, 0.0
        %vm1088 = vcmp.ge.f32.partialorder %v1018, 0.0
        %vm1089 = vcmp.ge.f32.partialorder %v1023, 0.0
        %vm1090 = vcmp.ge.f32.partialorder %v1026, 0.0
        %vm1091 = vcmp.ge.f32.partialorder %v1031, 0.0
        %vm1092 = vcmp.ge.f32.partialorder %v1034, 0.0
        %vm1093 = vcmp.ge.f32.partialorder %v1039, 0.0
        %vm1094 = vcmp.ge.f32.partialorder %v1042, 0.0
        %vm1095 = vcmp.ge.f32.partialorder %v1047, 0.0
        %vm1096 = vcmp.ge.f32.partialorder %v1050, 0.0
        %vm1097 = vcmp.ge.f32.partialorder %v1055, 0.0
        %vm1098 = vcmp.ge.f32.partialorder %v1058, 0.0
        %vm1099 = vcmp.ge.f32.partialorder %v1063, 0.0
        %vm1100 = vcmp.ge.f32.partialorder %v1066, 0.0
        %v1101 = vstv %s296
        %v1102 = vmul.f32 %v1101, %v943
        %v1103 = vmul.f32 %v1101, %v946
        %v1104 = vmul.f32 %v1101, %v951
        %v1105 = vmul.f32 %v1101, %v954
        %v1106 = vmul.f32 %v1101, %v959
        %v1107 = vmul.f32 %v1101, %v962
        %v1108 = vmul.f32 %v1101, %v967
        %v1109 = vmul.f32 %v1101, %v970
        %v1110 = vmul.f32 %v1101, %v975
        %v1111 = vmul.f32 %v1101, %v978
        %v1112 = vmul.f32 %v1101, %v983
        %v1113 = vmul.f32 %v1101, %v986
        %v1114 = vmul.f32 %v1101, %v991
        %v1115 = vmul.f32 %v1101, %v994
        %v1116 = vmul.f32 %v1101, %v999
        %v1117 = vmul.f32 %v1101, %v1002
        %v1118 = vmul.f32 %v1101, %v1007
        %v1119 = vmul.f32 %v1101, %v1010
        %v1120 = vmul.f32 %v1101, %v1015
        %v1121 = vmul.f32 %v1101, %v1018
        %v1122 = vmul.f32 %v1101, %v1023
        %v1123 = vmul.f32 %v1101, %v1026
        %v1124 = vmul.f32 %v1101, %v1031
        %v1125 = vmul.f32 %v1101, %v1034
        %v1126 = vmul.f32 %v1101, %v1039
        %v1127 = vmul.f32 %v1101, %v1042
        %v1128 = vmul.f32 %v1101, %v1047
        %v1129 = vmul.f32 %v1101, %v1050
        %v1130 = vmul.f32 %v1101, %v1055
        %v1131 = vmul.f32 %v1101, %v1058
        %v1132 = vmul.f32 %v1101, %v1063
        %v1133 = vmul.f32 %v1101, %v1066
        %v1134 = vsel %vm1069, %v943, %v1102
        %v1135 = vsel %vm1070, %v946, %v1103
        %v1136 = vsel %vm1071, %v951, %v1104
        %v1137 = vsel %vm1072, %v954, %v1105
        %v1138 = vsel %vm1073, %v959, %v1106
        %v1139 = vsel %vm1074, %v962, %v1107
        %v1140 = vsel %vm1075, %v967, %v1108
        %v1141 = vsel %vm1076, %v970, %v1109
        %v1142 = vsel %vm1077, %v975, %v1110
        %v1143 = vsel %vm1078, %v978, %v1111
        %v1144 = vsel %vm1079, %v983, %v1112
        %v1145 = vsel %vm1080, %v986, %v1113
        %v1146 = vsel %vm1081, %v991, %v1114
        %v1147 = vsel %vm1082, %v994, %v1115
        %v1148 = vsel %vm1083, %v999, %v1116
        %v1149 = vsel %vm1084, %v1002, %v1117
        %v1150 = vsel %vm1085, %v1007, %v1118
        %v1151 = vsel %vm1086, %v1010, %v1119
        %v1152 = vsel %vm1087, %v1015, %v1120
        %v1153 = vsel %vm1088, %v1018, %v1121
        %v1154 = vsel %vm1089, %v1023, %v1122
        %v1155 = vsel %vm1090, %v1026, %v1123
        %v1156 = vsel %vm1091, %v1031, %v1124
        %v1157 = vsel %vm1092, %v1034, %v1125
        %v1158 = vsel %vm1093, %v1039, %v1126
        %v1159 = vsel %vm1094, %v1042, %v1127
        %v1160 = vsel %vm1095, %v1047, %v1128
        %v1161 = vsel %vm1096, %v1050, %v1129
        %v1162 = vsel %vm1097, %v1055, %v1130
        %v1163 = vsel %vm1098, %v1058, %v1131
        %v1164 = vsel %vm1099, %v1063, %v1132
        %v1165 = vsel %vm1100, %v1066, %v1133
        %v1166 = vld [vmem:[%s5] sm:$0xf]
        %v1167 = vpack.c.bf16 %v1135, %v1134
        %v1168 = vpack.c.bf16 %v1137, %v1136
        %v1169 = vpack.c.bf16 %v1139, %v1138
        %v1170 = vpack.c.bf16 %v1141, %v1140
        %v1171 = vpack.c.bf16 %v1143, %v1142
        %v1172 = vpack.c.bf16 %v1145, %v1144
        %v1173 = vpack.c.bf16 %v1147, %v1146
        %v1174 = vpack.c.bf16 %v1149, %v1148
        %v1175 = vpack.c.bf16 %v1151, %v1150
        %v1176 = vpack.c.bf16 %v1153, %v1152
        %v1177 = vpack.c.bf16 %v1155, %v1154
        %v1178 = vpack.c.bf16 %v1157, %v1156
        %v1179 = vpack.c.bf16 %v1159, %v1158
        %v1180 = vpack.c.bf16 %v1161, %v1160
        %v1181 = vpack.c.bf16 %v1163, %v1162
        %v1182 = vpack.c.bf16 %v1165, %v1164
        %v1183 = vstv %s297
        %1184 = vmatprep.subr.bf16.mxu0 0
        %1185 = vmatpush1.bf16.xpose.msra.mxu0 %v1174
        %1186 = vmatprep.subr.bf16.mxu0 0
        %1187 = vmatpush1.bf16.xpose.msra.mxu0 %v1173
        %1188 = vmatprep.subr.bf16.mxu0 0
        %1189 = vmatpush1.bf16.xpose.msra.mxu0 %v1172
        %1190 = vmatprep.subr.bf16.mxu0 0
        %1191 = vmatpush1.bf16.xpose.msra.mxu0 %v1171
        %1192 = vmatprep.subr.bf16.mxu0 0
        %1193 = vmatpush1.bf16.xpose.msra.mxu0 %v1170
        %1194 = vmatprep.subr.bf16.mxu0 0
        %1195 = vmatpush1.bf16.xpose.msra.mxu0 %v1169
        %1196 = vmatprep.subr.bf16.mxu0 0
        %1197 = vmatpush1.bf16.xpose.msra.mxu0 %v1168
        %1198 = vmatprep.subr.bf16.mxu0 0
        %1199 = vmatpush1.bf16.xpose.msra.mxu0 %v1167
        %1200 = vmatprep.subr.bf16.mxu0 0
        %1201 = vmatpush2.bf16.xpose.msra.mxu0 %v1182
        %1202 = vmatprep.subr.bf16.mxu0 0
        %1203 = vmatpush2.bf16.xpose.msra.mxu0 %v1181
        %1204 = vmatprep.subr.bf16.mxu0 0
        %1205 = vmatpush2.bf16.xpose.msra.mxu0 %v1180
        %1206 = vmatprep.subr.bf16.mxu0 0
        %1207 = vmatpush2.bf16.xpose.msra.mxu0 %v1179
        %1208 = vmatprep.subr.bf16.mxu0 0
        %1209 = vmatpush2.bf16.xpose.msra.mxu0 %v1178
        %1210 = vmatprep.subr.bf16.mxu0 0
        %1211 = vmatpush2.bf16.xpose.msra.mxu0 %v1177
        %1212 = vmatprep.subr.bf16.mxu0 0
        %1213 = vmatpush2.bf16.xpose.msra.mxu0 %v1176
        %1214 = vmatprep.subr.bf16.mxu0 0
        %1215 = vmatpush2.bf16.xpose.msra.mxu0 %v1175
        %1216 = vmatprep.mubr.bf16.mxu0 0
        %1217 = vmatmul.mubr.bf16.gmra.mxu0 %v1166
        %v1218 = vpop.f32.mrf.mxu0
        %v1219 = vadd.f32 %v1183, %v1218
        %v1220 = vpop.f32.mrf.mxu0
        %v1221 = vadd.f32 %v1183, %v1220
        %v1222 = vpop.f32.mrf.mxu0
        %v1223 = vpop.f32.mrf.mxu0
        %1224 = vdwg.mxu0
        %v1225 = vsub.f32 0.0, %v1219
        %v1226 = vsub.f32 0.0, %v1221
        %v1227 = vmul.f32 %v1225, 1.442695
        %v1228 = vpow.pop %v1227
        %v1229 = vmul.f32 %v1226, 1.442695
        %v1230 = vpow.pop %v1229
        %v1231 = vadd.f32 %v1228, 1.0
        %v1232 = vadd.f32 %v1230, 1.0
        %v1233 = vrcp.pop %v1231
        %v1234 = vrcp.pop %v1232
        %1235 = vst [vmem:[%s294] sm:$0xff] %v1233
        %1236 = vst [vmem:[%s294 + $0x8] sm:$0xff] %v1234
        %p1237 = scmp.lt.s32.totalorder %s19, 1
        %s1238 = scalar_select %p1237, %s19, 1
        %s1239 = smul.addr %s1238, 2
        %s1240 = smul.addr %s1239, 8
        %s1241 = scalar_lea.vmem %s7, %s1240
        // Predicated region
        $region53: #{salary_predictor_forward.1} parent=47 // pred_check
          %p1242 = pneg %p189
        $region54: #{salary_predictor_forward.1} parent=47 // pred_check_branch
          %1244 = sbr.rel (%p1242) target = $region56
        $region55: #{salary_predictor_forward.1} parent=47 // pred_region
          _
        $region56: #{salary_predictor_forward.1} parent=47 // pred_fallthru
          _
      $region48: #{salary_predictor_forward.1} parent=5 // pred_fallthru
        _
      %p1245 = scmp.le.s32.totalorder 2, %s14
      // Predicated region
      $region57: #{salary_predictor_forward.1} parent=5 // pred_check
        %p1246 = pneg %p1245
      $region58: #{salary_predictor_forward.1} parent=5 // pred_check_branch
        %1248 = sbr.rel (%p1246) target = $region60
      $region59: #{salary_predictor_forward.1} parent=5 // pred_region
        %s1249 = ssub.s32 %s14, 2
        // Predicated region
        $region61: #{salary_predictor_forward.1} parent=59 // pred_check
          %p1250 = pneg %p195
        $region62: #{salary_predictor_forward.1} parent=59 // pred_check_branch
          %1252 = sbr.rel (%p1250) target = $region64
        $region63: #{salary_predictor_forward.1} parent=59 // pred_region
          %p1253 = scmp.lt.s32.totalorder %s20, 1
          %s1254 = scalar_select %p1253, %s20, 1
          %s1255 = smul.addr %s1254, 2
          %s1256 = smul.addr %s1255, 8
          %s1257 = scalar_lea.vmem %s7, %s1256
        $region64: #{salary_predictor_forward.1} parent=59 // pred_fallthru
          _
      $region60: #{salary_predictor_forward.1} parent=5 // pred_fallthru
        _
    $region6: #{salary_predictor_forward.1} parent=1 // loop_footer
      %s18 = sadd.s32 1, %s14
    $region7: #{salary_predictor_forward.1} parent=1 // loop_footer_branch
      %13 = sbr.rel target = $region3
    $region8: #{salary_predictor_forward.1} parent=1 // loop_exit
      _
    %1258 = vsyncpa [#allocation3], 1
    %s1259 = scalar_lea.sflag [#allocation3], 1
    %1260 = vsyncpa %s1259, 1

</llo_original>
